<compile_context>
chip_gen: v5e
topology: v5e:2x2
jax: 0.10.0
libtpu: 0.0.40
codegen_flags: <defaults>
</compile_context>

<pallas_src>
import jax
import jax.numpy as jnp
from jax.experimental import pallas as pl
from jax.experimental.pallas import tpu as pltpu


def _make_kernel(C: int, S: int, R: int, needs_row_mask: bool):
    def kernel(x_ref, t_ref, o_ref):
        # grid = (batch_block, row_block); both accumulate into the same
        # (1, 128) output block, so both axes are "arbitrary".
        i = pl.program_id(0)
        j = pl.program_id(1)

        @pl.when((i == 0) & (j == 0))
        def _init():
            o_ref[...] = jnp.zeros_like(o_ref)

        # Streamed channel sum over dense (Bt, S, 128) slabs, accumulated in
        # f32.  Static loop: each iteration is one whole-slab cast+add at the
        # MLIR level, live range is ~2 slabs regardless of C.
        # (For very large C a lax.fori_loop over the channel axis would bound
        #  code size further; not needed at typical landmark channel counts.)
        s = x_ref[:, 0, :, :].astype(jnp.float32)
        for c in range(1, C):
            s = s + x_ref[:, c, :, :].astype(jnp.float32)

        d = s - t_ref[:, 0, :, :].astype(jnp.float32)          # (Bt, S, 128)

        if needs_row_mask:
            # Last row-block may extend past R valid rows (Pallas partial block
            # contents are unspecified) -> zero them BEFORE squaring.
            rows = j * S + jax.lax.broadcasted_iota(jnp.int32, d.shape, 1)
            d = jnp.where(rows < R, d, 0.0)

        sq = d * d                                              # (Bt, S, 128)
        blk = jnp.sum(sq, axis=0)                               # (S, 128)  VPU adds
        o_ref[...] += jnp.sum(blk, axis=0, keepdims=True)       # (1, 128)  one XLU reduce

    return kernel


def mse_loss_landmark(x, target, *, x_block_budget_bytes: int = 2 * 1024 * 1024):
    """x: (B, C, H, W), target: (B, H, W) -> scalar f32 loss."""
    B, C, H, W = x.shape
    assert target.shape == (B, H, W)
    HW = H * W
    denom = float(B * HW)

    # ---- Lane+sublane dense layout: spatial -> (R rows, 128 lanes). ----
    R = pl.cdiv(HW, 128)
    HW_pad = R * 128

    xf = x.reshape(B, C, HW)
    tf = target.reshape(B, 1, HW)
    if HW_pad != HW:
        # Minimal pad (to next multiple of 128 only).  Zero padding contributes
        # (0 - 0)^2 = 0; the mean denominator stays the true B*H*W.
        pad = HW_pad - HW
        xf = jnp.pad(xf, ((0, 0), (0, 0), (0, pad)))
        tf = jnp.pad(tf, ((0, 0), (0, 0), (0, pad)))
    xf = xf.reshape(B, C, R, 128)
    tf = tf.reshape(B, 1, R, 128)

    itemsize_x = jnp.dtype(x.dtype).itemsize
    itemsize_t = jnp.dtype(target.dtype).itemsize

    # ---- Block sizing from a byte budget of x per grid step. ----
    per_row_bytes = C * 128 * itemsize_x        # one (C, 1, 128) row of x
    per_batch_bytes = per_row_bytes * R

    if per_batch_bytes <= x_block_budget_bytes:
        # Fold whole batch rows into one block (largest divisor of B under cap).
        cap = min(B, max(1, x_block_budget_bytes // per_batch_bytes))
        Bt = 1
        for cand in range(cap, 0, -1):
            if B % cand == 0:
                Bt = cand
                break
        S = R                                   # full row extent per block
    else:
        # One batch row per block, tile the row axis in multiples of 8.
        Bt = 1
        S = max(8, (x_block_budget_bytes // per_row_bytes) // 8 * 8)
        S = min(S, R)

    n_b = B // Bt
    n_j = pl.cdiv(R, S)
    needs_row_mask = (S < R) and (R % S != 0)

    kernel = _make_kernel(C, S, R, needs_row_mask)

    cost = pl.CostEstimate(
        flops=B * C * HW_pad + 3 * B * HW_pad,
        transcendentals=0,
        bytes_accessed=B * C * HW_pad * itemsize_x + B * HW_pad * itemsize_t + 512,
    )

    partial = pl.pallas_call(
        kernel,
        out_shape=jax.ShapeDtypeStruct((1, 128), jnp.float32),
        grid_spec=pltpu.PrefetchScalarGridSpec(
            num_scalar_prefetch=0,
            grid=(n_b, n_j),
            in_specs=[
                pl.BlockSpec((Bt, C, S, 128), lambda i, j: (i, 0, j, 0)),
                pl.BlockSpec((Bt, 1, S, 128), lambda i, j: (i, 0, j, 0)),
            ],
            # Constant output block index across the whole grid -> VMEM-resident
            # accumulator; written back to HBM once at the end.
            out_specs=pl.BlockSpec((1, 128), lambda i, j: (0, 0)),
        ),
        compiler_params=pltpu.CompilerParams(
            dimension_semantics=("arbitrary", "arbitrary"),
        ),
        cost_estimate=cost,
    )(xf, tf)

    # Final lane reduce + mean * 97 in the wrapper.
    return jnp.sum(partial) * (97.0 / denom)


def mse_loss_landmark_ref(x, target):
    s = jnp.sum(x, axis=1)
    return jnp.mean((s.astype(jnp.float32) - target.astype(jnp.float32)) ** 2) * 97.0


if __name__ == "__main__":
    key = jax.random.PRNGKey(0)
    k1, k2, k3, k4, k5, k6 = jax.random.split(key, 6)

    # 1) Primary shape: H*W = 256 (no padding), whole batch folded into one block.
    B, C, H, W = 2, 4, 16, 16
    x = jax.random.normal(k1, (B, C, H, W), dtype=jnp.float32)
    t = jax.random.normal(k2, (B, H, W), dtype=jnp.float32)
    loss = jax.block_until_ready(mse_loss_landmark(x, t))
    ref = mse_loss_landmark_ref(x, t)
    assert jnp.allclose(loss, ref, rtol=1e-5, atol=1e-4), (loss, ref)

    # 2) Ragged H*W = 100 (lane padding path, R = 1).
    x2 = jax.random.normal(k3, (2, 3, 10, 10), dtype=jnp.float32)
    t2 = jax.random.normal(k4, (2, 10, 10), dtype=jnp.float32)
    loss2 = jax.block_until_ready(mse_loss_landmark(x2, t2))
    ref2 = mse_loss_landmark_ref(x2, t2)
    assert jnp.allclose(loss2, ref2, rtol=1e-5, atol=1e-4), (loss2, ref2)

    # 3) Small shape with a tiny block budget to exercise row tiling + the
    #    in-kernel row mask (R = 13, S = 8, R % S != 0) and lane padding.
    x3 = jax.random.normal(k5, (2, 3, 40, 40), dtype=jnp.float32)
    t3 = jax.random.normal(k6, (2, 40, 40), dtype=jnp.float32)
    loss3 = jax.block_until_ready(
        mse_loss_landmark(x3, t3, x_block_budget_bytes=8 * 1024))
    ref3 = mse_loss_landmark_ref(x3, t3)
    assert jnp.allclose(loss3, ref3, rtol=1e-5, atol=1e-4), (loss3, ref3)

    print("KERNEL_OK")
</pallas_src>

<mosaic_0001>
module attributes {stable_mosaic.version = 11 : i64} {
  func.func @kernel(%arg0: i32, %arg1: i32, %arg2: memref<2x4x2x128xf32, #tpu.memory_space<vmem>>, %arg3: memref<2x1x2x128xf32, #tpu.memory_space<vmem>>, %arg4: memref<1x128xf32, #tpu.memory_space<vmem>>) attributes {dimension_semantics = [#tpu.dimension_semantics<arbitrary>, #tpu.dimension_semantics<arbitrary>], iteration_bounds = array<i64: 1, 1>, scalar_prefetch = 0 : i64, scratch_operands = 0 : i64, tpu.core_type = #tpu.core_type<tc>, window_params = [{transform_indices = @transform_0, window_bounds = array<i64: 2, 4, 2, 128>}, {transform_indices = @transform_1, window_bounds = array<i64: 2, 1, 2, 128>}, {pipeline_mode = #tpu.pipeline_mode<synchronous>, transform_indices = @transform_2, window_bounds = array<i64: 1, 128>}]} {
    %c0_i32 = arith.constant 0 : i32
    %0 = arith.cmpi eq, %arg0, %c0_i32 : i32
    %c0_i32_0 = arith.constant 0 : i32
    %1 = arith.cmpi eq, %arg1, %c0_i32_0 : i32
    %2 = arith.andi %0, %1 : i1
    %3 = arith.extui %2 : i1 to i32
    %c0_i32_1 = arith.constant 0 : i32
    %4 = arith.cmpi ne, %3, %c0_i32_1 : i32
    scf.if %4 {
      %cst_23 = arith.constant 0.000000e+00 : f32
      %26 = vector.broadcast %cst_23 : f32 to vector<1x128xf32>
      %c0_24 = arith.constant 0 : index
      %c0_25 = arith.constant 0 : index
      %27 = vector.load %arg4[%c0_24, %c0_25] : memref<1x128xf32, #tpu.memory_space<vmem>>, vector<1x128xf32>
      tpu.vector_store %arg4[%c0_24, %c0_25], %26 {strides = array<i32>} : memref<1x128xf32, #tpu.memory_space<vmem>>, vector<1x128xf32>,
    } else {
    }
    %c0 = arith.constant 0 : index
    %c0_2 = arith.constant 0 : index
    %c0_3 = arith.constant 0 : index
    %c0_4 = arith.constant 0 : index
    %5 = vector.load %arg2[%c0, %c0_2, %c0_3, %c0_4] : memref<2x4x2x128xf32, #tpu.memory_space<vmem>>, vector<2x1x2x128xf32>
    %6 = vector.shape_cast %5 : vector<2x1x2x128xf32> to vector<2x2x128xf32>
    %c0_5 = arith.constant 0 : index
    %c1 = arith.constant 1 : index
    %c0_6 = arith.constant 0 : index
    %c0_7 = arith.constant 0 : index
    %7 = vector.load %arg2[%c0_5, %c1, %c0_6, %c0_7] : memref<2x4x2x128xf32, #tpu.memory_space<vmem>>, vector<2x1x2x128xf32>
    %8 = vector.shape_cast %7 : vector<2x1x2x128xf32> to vector<2x2x128xf32>
    %9 = arith.addf %6, %8 : vector<2x2x128xf32>
    %c0_8 = arith.constant 0 : index
    %c2 = arith.constant 2 : index
    %c0_9 = arith.constant 0 : index
    %c0_10 = arith.constant 0 : index
    %10 = vector.load %arg2[%c0_8, %c2, %c0_9, %c0_10] : memref<2x4x2x128xf32, #tpu.memory_space<vmem>>, vector<2x1x2x128xf32>
    %11 = vector.shape_cast %10 : vector<2x1x2x128xf32> to vector<2x2x128xf32>
    %12 = arith.addf %9, %11 : vector<2x2x128xf32>
    %c0_11 = arith.constant 0 : index
    %c3 = arith.constant 3 : index
    %c0_12 = arith.constant 0 : index
    %c0_13 = arith.constant 0 : index
    %13 = vector.load %arg2[%c0_11, %c3, %c0_12, %c0_13] : memref<2x4x2x128xf32, #tpu.memory_space<vmem>>, vector<2x1x2x128xf32>
    %14 = vector.shape_cast %13 : vector<2x1x2x128xf32> to vector<2x2x128xf32>
    %15 = arith.addf %12, %14 : vector<2x2x128xf32>
    %c0_14 = arith.constant 0 : index
    %c0_15 = arith.constant 0 : index
    %c0_16 = arith.constant 0 : index
    %c0_17 = arith.constant 0 : index
    %16 = vector.load %arg3[%c0_14, %c0_15, %c0_16, %c0_17] : memref<2x1x2x128xf32, #tpu.memory_space<vmem>>, vector<2x1x2x128xf32>
    %17 = vector.shape_cast %16 : vector<2x1x2x128xf32> to vector<2x2x128xf32>
    %18 = arith.subf %15, %17 : vector<2x2x128xf32>
    %19 = arith.mulf %18, %18 : vector<2x2x128xf32>
    %cst = arith.constant dense<0.000000e+00> : vector<2x128xf32>
    %20 = vector.multi_reduction <add>, %19, %cst [0] : vector<2x2x128xf32> to vector<2x128xf32>
    %c0_18 = arith.constant 0 : index
    %c0_19 = arith.constant 0 : index
    %21 = vector.load %arg4[%c0_18, %c0_19] : memref<1x128xf32, #tpu.memory_space<vmem>>, vector<1x128xf32>
    %cst_20 = arith.constant dense<0.000000e+00> : vector<128xf32>
    %22 = vector.multi_reduction <add>, %20, %cst_20 [0] : vector<2x128xf32> to vector<128xf32>
    %23 = vector.shape_cast %22 : vector<128xf32> to vector<1x128xf32>
    %24 = arith.addf %21, %23 : vector<1x128xf32>
    %c0_21 = arith.constant 0 : index
    %c0_22 = arith.constant 0 : index
    %25 = vector.load %arg4[%c0_21, %c0_22] : memref<1x128xf32, #tpu.memory_space<vmem>>, vector<1x128xf32>
    tpu.vector_store %arg4[%c0_21, %c0_22], %24 {strides = array<i32>} : memref<1x128xf32, #tpu.memory_space<vmem>>, vector<1x128xf32>,
    return
  }
  func.func @transform_0(%arg0: i32, %arg1: i32) -> (i32, i32, i32, i32) {
    %c0_i32 = arith.constant 0 : i32
    %c0_i32_0 = arith.constant 0 : i32
    %c0_i32_1 = arith.constant 0 : i32
    return %arg0, %c0_i32, %arg1, %c0_i32_0 : i32, i32, i32, i32
  }
  func.func @transform_1(%arg0: i32, %arg1: i32) -> (i32, i32, i32, i32) {
    %c0_i32 = arith.constant 0 : i32
    %c0_i32_0 = arith.constant 0 : i32
    %c0_i32_1 = arith.constant 0 : i32
    return %arg0, %c0_i32, %arg1, %c0_i32_0 : i32, i32, i32, i32
  }
  func.func @transform_2(%arg0: i32, %arg1: i32) -> (i32, i32) {
    %c0_i32 = arith.constant 0 : i32
    %c0_i32_0 = arith.constant 0 : i32
    %c0_i32_1 = arith.constant 0 : i32
    return %c0_i32, %c0_i32_0 : i32, i32
  }
}

</mosaic_0001>

<llo_original>
// kernel: tpu_custom_call.1
$region0: #{tpu_custom_call.1}
  #allocation0 [shape = 'u32[]', space=smem, size = 0x4, offset = 0x4, fixed_abs, tag = 'smem constant byte address 0x4 - core index']
  #allocation1 [shape = 'u32[72,128]{1,0:T(1,128)}', space=vmem, size = 0x9000, scoped, tag = 'internal scratch']
  %s0 = inlined_call_operand.hbm [shape: f32[2,4,2,128], index: 0, kind: input, shape index: {}]
  %s1 = inlined_call_operand.hbm [shape: f32[2,1,2,128], index: 1, kind: input, shape index: {}]
  %s2 = inlined_call_operand.hbm [shape: f32[1,128], index: 2, kind: output, shape index: {}]
  %s3 = sld [smem:[#allocation0]]
  $region30: #{tpu_custom_call.1} parent=0
    _
  %s5 = ssub.s32 1, %s3
  %s6 = scalar_select 0, %s5, %s3
  $region1: #{tpu_custom_call.1} parent=0
    #allocation2 [shape = 'u8[8192]{0}', space=vmem, size = 0x2000, scoped, tag = 'input window, operand 0, single buffered']
    #allocation3 [shape = 's32[1]{0}', space=sflag, size = 0x4, scoped, tag = 'scoped memory for tpu_custom_call.1']
    #allocation4 [shape = 's32[1]{0}', space=sflag, size = 0x4, scoped, tag = 'scoped memory for tpu_custom_call.1']
    #allocation5 [shape = 'u8[2048]{0}', space=vmem, size = 0x800, scoped, tag = 'input window, operand 1, single buffered']
    #allocation6 [shape = 's32[1]{0}', space=sflag, size = 0x4, scoped, tag = 'scoped memory for tpu_custom_call.1']
    #allocation7 [shape = 'u8[512]{0}', space=vmem, size = 0x400, scoped, tag = 'output window, operand 0, single buffered']
    %7 = vsyncpa [#allocation3], 0
    %8 = vsyncpa [#allocation6], 0
    %9 = vsyncpa [#allocation4], 0
    // Predicated region
    $region2: #{tpu_custom_call.1} parent=1 // pred_check
      _
    $region3: #{tpu_custom_call.1} parent=1 // pred_check_branch
      %11 = sbr.rel (0) target = $region5
    $region4: #{tpu_custom_call.1} parent=1 // pred_region
      %13 = vsyncadd [#allocation3], 0
      %s14 = sshll.u32 %s0, 4
      %s15 = int_to_ptr.hbm [resolvable:$true] %s14
      %s16 = sshll.u32 [#allocation2], 4
      %s17 = int_to_ptr.vmem [resolvable:$true] %s16
      %22 = dma.hbm_to_vmem [thread:$0]  %s15, 256, %s17, [#allocation3], 32, 32, 2
    $region5: #{tpu_custom_call.1} parent=1 // pred_fallthru
      _
    // Predicated region
    $region6: #{tpu_custom_call.1} parent=1 // pred_check
      _
    $region7: #{tpu_custom_call.1} parent=1 // pred_check_branch
      %24 = sbr.rel (0) target = $region9
    $region8: #{tpu_custom_call.1} parent=1 // pred_region
      %26 = vsyncadd [#allocation6], 0
      %s27 = sshll.u32 %s1, 4
      %s28 = int_to_ptr.hbm [resolvable:$true] %s27
      %s29 = sshll.u32 [#allocation5], 4
      %s30 = int_to_ptr.vmem [resolvable:$true] %s29
      %35 = dma.hbm_to_vmem [thread:$0]  %s28, 64, %s30, [#allocation6], 32, 32, 2
    $region9: #{tpu_custom_call.1} parent=1 // pred_fallthru
      _
    // Predicated region
    $region10: #{tpu_custom_call.1} parent=1 // pred_check
      _
    $region11: #{tpu_custom_call.1} parent=1 // pred_check_branch
      %37 = sbr.rel (0) target = $region13
    $region12: #{tpu_custom_call.1} parent=1 // pred_region
      %39 = dma.done [#allocation3], 256
    $region13: #{tpu_custom_call.1} parent=1 // pred_fallthru
      _
    // Predicated region
    $region14: #{tpu_custom_call.1} parent=1 // pred_check
      _
    $region15: #{tpu_custom_call.1} parent=1 // pred_check_branch
      %41 = sbr.rel (0) target = $region17
    $region16: #{tpu_custom_call.1} parent=1 // pred_region
      %43 = dma.done [#allocation6], 64
    $region17: #{tpu_custom_call.1} parent=1 // pred_fallthru
      _
    %p44 = scmp.eq.s32.totalorder 0, 0
    %p45 = scmp.eq.s32.totalorder 0, 0
    %p46 = pnand %p44, %p45
    %p47 = pneg %p46
    // Predicated region
    $region18: #{tpu_custom_call.1} parent=1 // pred_check
      _
    $region19: #{tpu_custom_call.1} parent=1 // pred_check_branch
      %49 = sbr.rel (%p46) target = $region21
    $region20: #{tpu_custom_call.1} parent=1 // pred_region
      %50 = vst [vmem:[#allocation7] sm:$0x1] 0.0
    $region21: #{tpu_custom_call.1} parent=1 // pred_fallthru
      _
    %v51 = vld [vmem:[#allocation2] sm:$0x3]
    %v52 = vld [vmem:[#allocation2 + $0x8] sm:$0x3]
    %s53 = scalar_lea.vmem [#allocation2], 2
    %v54 = vld [vmem:[%s53] sm:$0x3]
    %v55 = vld [vmem:[%s53 + $0x8] sm:$0x3]
    %v56 = vadd.f32 %v51, %v54
    %v57 = vadd.f32 %v52, %v55
    %s58 = scalar_lea.vmem [#allocation2], 4
    %v59 = vld [vmem:[%s58] sm:$0x3]
    %v60 = vld [vmem:[%s58 + $0x8] sm:$0x3]
    %v61 = vadd.f32 %v56, %v59
    %v62 = vadd.f32 %v57, %v60
    %s63 = scalar_lea.vmem [#allocation2], 6
    %v64 = vld [vmem:[%s63] sm:$0x3]
    %v65 = vld [vmem:[%s63 + $0x8] sm:$0x3]
    %v66 = vadd.f32 %v61, %v64
    %v67 = vadd.f32 %v62, %v65
    %v68 = vld [vmem:[#allocation5] sm:$0x3]
    %v69 = vld [vmem:[#allocation5 + $0x2] sm:$0x3]
    %v70 = vsub.f32 %v66, %v68
    %v71 = vsub.f32 %v67, %v69
    %v72 = vmul.f32 %v70, %v70
    %v73 = vmul.f32 %v71, %v71
    %vm74 = vcmask 1041408
    %v75 = vsel %vm74, %v72, 0.0
    %v76 = vsel %vm74, %v73, 0.0
    %v77 = vadd.f32 %v75, %v76
    %v78 = vld [vmem:[#allocation7] sm:$0x1]
    %v79 = vsel %vm74, %v77, 0.0
    %v80 = vrot.slane %v79, 4
    %v81 = vadd.f32 %v79, %v80
    %v82 = vrot.slane %v81, 2
    %v83 = vadd.f32 %v81, %v82
    %v84 = vrot.slane %v83, 1
    %v85 = vadd.f32 %v83, %v84
    %v86 = vadd.f32 %v78, %v85
    %87 = vst [vmem:[#allocation7] sm:$0x1] %v86
    // Predicated region
    $region22: #{tpu_custom_call.1} parent=1 // pred_check
      _
    $region23: #{tpu_custom_call.1} parent=1 // pred_check_branch
      %89 = sbr.rel (0) target = $region25
    $region24: #{tpu_custom_call.1} parent=1 // pred_region
      %91 = vsyncadd [#allocation4], 0
      %s93 = sshll.u32 [#allocation7], 4
      %s94 = int_to_ptr.vmem [resolvable:$true] %s93
      %s95 = sshll.u32 %s2, 4
      %s96 = int_to_ptr.hbm [resolvable:$true] %s95
      %98 = dma.vmem_to_hbm [thread:$0]  %s94, 16, %s96, [#allocation4]
    $region25: #{tpu_custom_call.1} parent=1 // pred_fallthru
      _
    // Predicated region
    $region26: #{tpu_custom_call.1} parent=1 // pred_check
      _
    $region27: #{tpu_custom_call.1} parent=1 // pred_check_branch
      %100 = sbr.rel (0) target = $region29
    $region28: #{tpu_custom_call.1} parent=1 // pred_region
      %102 = dma.done [#allocation4], 16
    $region29: #{tpu_custom_call.1} parent=1 // pred_fallthru
      _
    %103 = vsyncpa [#allocation3], 1
    %104 = vsyncpa [#allocation6], 1
    %105 = vsyncpa [#allocation4], 1

</llo_original>
